<compile_context>
chip_gen: v5e
topology: v5e:2x2
jax: 0.10.0
libtpu: 0.0.40
codegen_flags: <defaults>
</compile_context>

<pallas_src>
import functools

import jax
import jax.numpy as jnp
from jax.experimental import pallas as pl
from jax.experimental.pallas import tpu as pltpu


def _round_up(x, m):
    return ((x + m - 1) // m) * m


def _sigmoid(x):
    # sigmoid(x) = 0.5 * (tanh(x/2) + 1): keeps the nonlinearity on the EUP
    # tanh path and avoids the divide of the default 1/(1+exp(-x)) lowering.
    return 0.5 * jnp.tanh(0.5 * x) + 0.5


def _lstm_chunk_kernel(xw_ref, w_ref, out_ref, h_sc, c_sc, *, hidden, unroll):
    """One (batch-tile, time-chunk) block of the LSTM recurrence.

    xw_ref : [time_chunk, Bt, 4H] f32   precomputed x @ W_ih^T + bias
             (gate order reordered to [i, f, o, g])
    w_ref  : [H, 4H]                    W_hh^T, same gate order, compute dtype
    out_ref: [time_chunk, Bt, H]        hidden-state outputs (f32)
    h_sc/c_sc: [Bt, H] f32 scratch      state carried across time chunks

    grid = (batch_tiles, time_chunks); the time axis is 'arbitrary'
    (sequential) so the scratch-carried recurrence is correct.
    """
    chunk = pl.program_id(1)

    @pl.when(chunk == 0)
    def _():
        h_sc[...] = jnp.zeros_like(h_sc)
        c_sc[...] = jnp.zeros_like(c_sc)

    t_chunk = xw_ref.shape[0]
    h = hidden

    def step(t, carry):
        del carry
        h_prev = h_sc[...]                                # [Bt, H]  f32
        c_prev = c_sc[...]                                # [Bt, H]  f32

        # Single K=H recurrent matmul on the MXU; x projection + bias were
        # hoisted out of the loop (already inside xw_ref).
        gates = xw_ref[t] + jnp.dot(
            h_prev.astype(w_ref.dtype), w_ref[...],
            preferred_element_type=jnp.float32)           # [Bt, 4H] f32

        # Gate order [i, f, o | g]: one sigmoid pass over 3H lanes, one tanh
        # pass over H lanes (no per-gate 128-lane padding).
        sfo = _sigmoid(gates[:, : 3 * h])
        g_g = jnp.tanh(gates[:, 3 * h:])
        i_g = sfo[:, 0 * h:1 * h]
        f_g = sfo[:, 1 * h:2 * h]
        o_g = sfo[:, 2 * h:3 * h]

        c_new = f_g * c_prev + i_g * g_g
        h_new = o_g * jnp.tanh(c_new)

        c_sc[...] = c_new
        h_sc[...] = h_new
        out_ref[t] = h_new.astype(out_ref.dtype)
        return 0

    jax.lax.fori_loop(0, t_chunk, step, 0, unroll=unroll)


@functools.partial(
    jax.jit,
    static_argnames=("hidden_size", "time_chunk", "batch_tile", "compute_dtype"),
)
def single_rnn_forward(inp, w_ih, w_hh, b_ih, b_hh, *, hidden_size,
                       time_chunk=None, batch_tile=None,
                       compute_dtype=jnp.bfloat16):
    """Forward of SingleRNN('LSTM', D, H) on inp of shape [B, S, D].

    w_ih: [4H, D], w_hh: [4H, H], b_ih/b_hh: [4H] in PyTorch layout (gate order
    i, f, g, o).  Returns [B, S, H] (`rnn_output`) with zero initial state.
    `compute_dtype` is the MXU operand dtype of the recurrent dot (bf16 is the
    fast path on every TPU generation); state and all gate math stay f32.
    """
    B, S, D = inp.shape
    H = hidden_size
    G = 4 * H
    hi = jax.lax.Precision.HIGHEST

    # ---- gate reorder: PyTorch (i, f, g, o) -> packed (i, f, o, g) ----------
    order = (0, 1, 3, 2)
    w_ih_r = jnp.concatenate([w_ih[k * H:(k + 1) * H] for k in order], axis=0)
    w_hh_r = jnp.concatenate([w_hh[k * H:(k + 1) * H] for k in order], axis=0)
    bias_r = jnp.concatenate([(b_ih + b_hh)[k * H:(k + 1) * H] for k in order])

    # ---- hoisted input projection: one big XLA matmul, M = B*S --------------
    xw = (jnp.dot(inp.reshape(B * S, D).astype(jnp.float32),
                  w_ih_r.T.astype(jnp.float32), precision=hi)
          + bias_r.astype(jnp.float32))                       # [B*S, 4H] f32
    xw = xw.reshape(B, S, G)

    # ---- tiling --------------------------------------------------------------
    if batch_tile is None:
        # multiple of 8 (sublane height), capped at MXU width.
        # TODO(synk): on v7x with B >= 16, pass batch_tile = round_up(B,16)//2
        #             so the 'parallel' axis has >= 2 blocks (2 TensorCores).
        batch_tile = min(_round_up(B, 8), 128)
    batch_tile = _round_up(batch_tile, 8)
    Bp = _round_up(B, batch_tile)
    num_b = Bp // batch_tile

    if time_chunk is None:
        # Large chunks amortize grid-step overhead; fine on v5e/v6e VMEM.
        # TODO(synk): size from the VMEM budget on v7x (64 MiB) for huge D/H.
        time_chunk = min(S, 128)
    num_chunks = pl.cdiv(S, time_chunk)
    S_pad = num_chunks * time_chunk

    # time-major, padded precomputed projection: [S_pad, Bp, 4H]
    xw_tm = jnp.transpose(xw, (1, 0, 2))
    if S_pad != S or Bp != B:
        xw_tm = jnp.pad(xw_tm, ((0, S_pad - S), (0, Bp - B), (0, 0)))

    # recurrent weight W_hh^T, gate-reordered: [H, 4H]
    w_hh_t = w_hh_r.T.astype(compute_dtype)

    # ---- explicit VMEM budget ------------------------------------------------
    wt_bytes = jnp.dtype(compute_dtype).itemsize
    vmem_est = (2 * time_chunk * batch_tile * G * 4        # xw blocks (x2 buf)
                + 2 * time_chunk * batch_tile * H * 4      # out blocks (x2 buf)
                + 2 * H * G * wt_bytes                     # weight (x2 buf)
                + 2 * batch_tile * H * 4)                  # h/c scratch
    vmem_limit = int(min(64 << 20, max(32 << 20, 2 * vmem_est)))

    kernel = functools.partial(
        _lstm_chunk_kernel, hidden=H, unroll=max(1, min(8, time_chunk)))

    out_tm = pl.pallas_call(
        kernel,
        out_shape=jax.ShapeDtypeStruct((S_pad, Bp, H), jnp.float32),
        grid_spec=pltpu.PrefetchScalarGridSpec(
            num_scalar_prefetch=0,
            grid=(num_b, num_chunks),
            in_specs=[
                pl.BlockSpec((time_chunk, batch_tile, G),
                             lambda b, t: (t, b, 0)),        # hoisted x proj
                pl.BlockSpec((H, G), lambda b, t: (0, 0)),   # W_hh^T
            ],
            out_specs=pl.BlockSpec((time_chunk, batch_tile, H),
                                   lambda b, t: (t, b, 0)),
            scratch_shapes=[
                pltpu.VMEM((batch_tile, H), jnp.float32),    # h state
                pltpu.VMEM((batch_tile, H), jnp.float32),    # c state
            ],
        ),
        compiler_params=pltpu.CompilerParams(
            # batch tiles are independent (megacore-shardable); the time
            # recurrence MUST stay sequential.
            dimension_semantics=("parallel", "arbitrary"),
            vmem_limit_bytes=vmem_limit,
        ),
    )(xw_tm, w_hh_t)

    # Drop time/batch padding, back to [B, S, H] (PyTorch batch_first output).
    return jnp.transpose(out_tm[:S, :B, :], (1, 0, 2))


def _reference_lstm(inp, w_ih, w_hh, b_ih, b_hh, hidden_size):
    """Pure-JAX reference replicating torch.nn.LSTM (batch_first, 1 layer)."""
    H = hidden_size
    bias = b_ih + b_hh
    hi = jax.lax.Precision.HIGHEST

    def step(carry, x_t):
        h, c = carry
        gates = (jnp.dot(x_t, w_ih.T, precision=hi)
                 + jnp.dot(h, w_hh.T, precision=hi) + bias)
        i = jax.nn.sigmoid(gates[:, 0 * H:1 * H])
        f = jax.nn.sigmoid(gates[:, 1 * H:2 * H])
        g = jnp.tanh(gates[:, 2 * H:3 * H])
        o = jax.nn.sigmoid(gates[:, 3 * H:4 * H])
        c = f * c + i * g
        h = o * jnp.tanh(c)
        return (h, c), h

    B = inp.shape[0]
    h0 = jnp.zeros((B, H), jnp.float32)
    c0 = jnp.zeros((B, H), jnp.float32)
    _, ys = jax.lax.scan(step, (h0, c0), jnp.transpose(inp, (1, 0, 2)))
    return jnp.transpose(ys, (1, 0, 2))


if __name__ == "__main__":
    # SingleRNN('LSTM', input_size=16, hidden_size=32, n_layers=1,
    #           dropout=0, bidirectional=False)
    B, S, D, H = 4, 8, 16, 32

    key = jax.random.PRNGKey(0)
    k_x, k1, k2, k3, k4 = jax.random.split(key, 5)

    # PyTorch nn.LSTM init: uniform(-1/sqrt(H), 1/sqrt(H)); gate order i,f,g,o.
    bound = 1.0 / (H ** 0.5)
    w_ih = jax.random.uniform(k1, (4 * H, D), jnp.float32, -bound, bound)
    w_hh = jax.random.uniform(k2, (4 * H, H), jnp.float32, -bound, bound)
    b_ih = jax.random.uniform(k3, (4 * H,), jnp.float32, -bound, bound)
    b_hh = jax.random.uniform(k4, (4 * H,), jnp.float32, -bound, bound)

    x = jax.random.normal(k_x, (B, S, D), jnp.float32)

    ref = _reference_lstm(x, w_ih, w_hh, b_ih, b_hh, H)

    # f32 recurrent-dot operands: tight check vs the f32 reference.
    out_f32 = single_rnn_forward(x, w_ih, w_hh, b_ih, b_hh, hidden_size=H,
                                 compute_dtype=jnp.float32)
    out_f32 = jax.block_until_ready(out_f32)
    assert out_f32.shape == (B, S, H)
    assert bool(jnp.allclose(out_f32, ref, atol=5e-3, rtol=5e-3))

    # bf16 recurrent-dot operands (fast MXU path on all generations;
    # state, gate math and the hoisted x projection stay f32).
    out_bf16 = single_rnn_forward(x, w_ih, w_hh, b_ih, b_hh, hidden_size=H,
                                  compute_dtype=jnp.bfloat16)
    out_bf16 = jax.block_until_ready(out_bf16)
    assert out_bf16.shape == (B, S, H)
    assert bool(jnp.allclose(out_bf16, ref, atol=5e-2, rtol=5e-2))

    print("KERNEL_OK")
</pallas_src>

<mosaic_0001>
module attributes {stable_mosaic.version = 11 : i64} {
  func.func @_lstm_chunk_kernel(%arg0: i32, %arg1: i32, %arg2: memref<8x8x128xf32, #tpu.memory_space<vmem>>, %arg3: memref<32x128xf32, #tpu.memory_space<vmem>>, %arg4: memref<8x8x32xf32, #tpu.memory_space<vmem>>, %arg5: memref<8x32xf32, #tpu.memory_space<vmem>>, %arg6: memref<8x32xf32, #tpu.memory_space<vmem>>) attributes {dimension_semantics = [#tpu.dimension_semantics<parallel>, #tpu.dimension_semantics<arbitrary>], iteration_bounds = array<i64: 1, 1>, scalar_prefetch = 0 : i64, scratch_operands = 2 : i64, tpu.core_type = #tpu.core_type<tc>, window_params = [{transform_indices = @transform_0, window_bounds = array<i64: 8, 8, 128>}, {pipeline_mode = #tpu.pipeline_mode<synchronous>, transform_indices = @transform_1, window_bounds = array<i64: 32, 128>}, {transform_indices = @transform_2, window_bounds = array<i64: 8, 8, 32>}]} {
    %c0_i32 = arith.constant 0 : i32
    %0 = arith.cmpi eq, %arg1, %c0_i32 : i32
    %1 = arith.extui %0 : i1 to i32
    %c0_i32_0 = arith.constant 0 : i32
    %2 = arith.cmpi ne, %1, %c0_i32_0 : i32
    scf.if %2 {
      %cst_144 = arith.constant 0.000000e+00 : f32
      %259 = vector.broadcast %cst_144 : f32 to vector<8x32xf32>
      %c0_145 = arith.constant 0 : index
      %c0_146 = arith.constant 0 : index
      %260 = vector.load %arg5[%c0_145, %c0_146] : memref<8x32xf32, #tpu.memory_space<vmem>>, vector<8x32xf32>
      tpu.vector_store %arg5[%c0_145, %c0_146], %259 {strides = array<i32>} : memref<8x32xf32, #tpu.memory_space<vmem>>, vector<8x32xf32>,
      %cst_147 = arith.constant 0.000000e+00 : f32
      %261 = vector.broadcast %cst_147 : f32 to vector<8x32xf32>
      %c0_148 = arith.constant 0 : index
      %c0_149 = arith.constant 0 : index
      %262 = vector.load %arg6[%c0_148, %c0_149] : memref<8x32xf32, #tpu.memory_space<vmem>>, vector<8x32xf32>
      tpu.vector_store %arg6[%c0_148, %c0_149], %261 {strides = array<i32>} : memref<8x32xf32, #tpu.memory_space<vmem>>, vector<8x32xf32>,
    } else {
    }
    %c0_i32_1 = arith.constant 0 : i32
    %c0 = arith.constant 0 : index
    %c0_2 = arith.constant 0 : index
    %3 = vector.load %arg5[%c0, %c0_2] : memref<8x32xf32, #tpu.memory_space<vmem>>, vector<8x32xf32>
    %c0_3 = arith.constant 0 : index
    %c0_4 = arith.constant 0 : index
    %4 = vector.load %arg6[%c0_3, %c0_4] : memref<8x32xf32, #tpu.memory_space<vmem>>, vector<8x32xf32>
    %5 = arith.index_cast %c0_i32_1 : i32 to index
    %c0_5 = arith.constant 0 : index
    %c0_6 = arith.constant 0 : index
    %6 = vector.load %arg2[%5, %c0_5, %c0_6] : memref<8x8x128xf32, #tpu.memory_space<vmem>>, vector<1x8x128xf32>
    %7 = vector.shape_cast %6 : vector<1x8x128xf32> to vector<8x128xf32>
    %c0_7 = arith.constant 0 : index
    %c0_8 = arith.constant 0 : index
    %8 = vector.load %arg3[%c0_7, %c0_8] : memref<32x128xf32, #tpu.memory_space<vmem>>, vector<32x128xf32>
    %cst = arith.constant dense<0.000000e+00> : vector<8x128xf32>
    %9 = tpu.matmul %3, %8, %cst {dimension_numbers = #tpu.dot_dimension_numbers<[1], [0], [0], [1], [0, 0, 1, 1], [], []>} : vector<8x32xf32>, vector<32x128xf32>, vector<8x128xf32> -> vector<8x128xf32>
    %10 = arith.addf %7, %9 : vector<8x128xf32>
    %11 = vector.extract_strided_slice %10 {offsets = [0, 0], sizes = [8, 96], strides = [1, 1]} : vector<8x128xf32> to vector<8x96xf32>
    %cst_9 = arith.constant 5.000000e-01 : f32
    %12 = vector.broadcast %cst_9 : f32 to vector<8x96xf32>
    %13 = arith.mulf %12, %11 : vector<8x96xf32>
    %14 = math.tanh %13 : vector<8x96xf32>
    %cst_10 = arith.constant 5.000000e-01 : f32
    %15 = vector.broadcast %cst_10 : f32 to vector<8x96xf32>
    %16 = arith.mulf %15, %14 : vector<8x96xf32>
    %cst_11 = arith.constant 5.000000e-01 : f32
    %17 = vector.broadcast %cst_11 : f32 to vector<8x96xf32>
    %18 = arith.addf %16, %17 : vector<8x96xf32>
    %19 = vector.extract_strided_slice %10 {offsets = [0, 96], sizes = [8, 32], strides = [1, 1]} : vector<8x128xf32> to vector<8x32xf32>
    %20 = math.tanh %19 : vector<8x32xf32>
    %21 = vector.extract_strided_slice %18 {offsets = [0, 0], sizes = [8, 32], strides = [1, 1]} : vector<8x96xf32> to vector<8x32xf32>
    %22 = vector.extract_strided_slice %18 {offsets = [0, 32], sizes = [8, 32], strides = [1, 1]} : vector<8x96xf32> to vector<8x32xf32>
    %23 = vector.extract_strided_slice %18 {offsets = [0, 64], sizes = [8, 32], strides = [1, 1]} : vector<8x96xf32> to vector<8x32xf32>
    %24 = arith.mulf %22, %4 : vector<8x32xf32>
    %25 = arith.mulf %21, %20 : vector<8x32xf32>
    %26 = arith.addf %24, %25 : vector<8x32xf32>
    %27 = math.tanh %26 : vector<8x32xf32>
    %28 = arith.mulf %23, %27 : vector<8x32xf32>
    %c0_12 = arith.constant 0 : index
    %c0_13 = arith.constant 0 : index
    %29 = vector.load %arg6[%c0_12, %c0_13] : memref<8x32xf32, #tpu.memory_space<vmem>>, vector<8x32xf32>
    tpu.vector_store %arg6[%c0_12, %c0_13], %26 {strides = array<i32>} : memref<8x32xf32, #tpu.memory_space<vmem>>, vector<8x32xf32>,
    %c0_14 = arith.constant 0 : index
    %c0_15 = arith.constant 0 : index
    %30 = vector.load %arg5[%c0_14, %c0_15] : memref<8x32xf32, #tpu.memory_space<vmem>>, vector<8x32xf32>
    tpu.vector_store %arg5[%c0_14, %c0_15], %28 {strides = array<i32>} : memref<8x32xf32, #tpu.memory_space<vmem>>, vector<8x32xf32>,
    %31 = arith.index_cast %c0_i32_1 : i32 to index
    %c0_16 = arith.constant 0 : index
    %c0_17 = arith.constant 0 : index
    %32 = vector.load %arg4[%31, %c0_16, %c0_17] : memref<8x8x32xf32, #tpu.memory_space<vmem>>, vector<1x8x32xf32>
    %33 = vector.shape_cast %32 : vector<1x8x32xf32> to vector<8x32xf32>
    %34 = vector.shape_cast %28 : vector<8x32xf32> to vector<1x8x32xf32>
    tpu.vector_store %arg4[%31, %c0_16, %c0_17], %34 {strides = array<i32>} : memref<8x8x32xf32, #tpu.memory_space<vmem>>, vector<1x8x32xf32>,
    %c1_i32 = arith.constant 1 : i32
    %c0_18 = arith.constant 0 : index
    %c0_19 = arith.constant 0 : index
    %35 = vector.load %arg5[%c0_18, %c0_19] : memref<8x32xf32, #tpu.memory_space<vmem>>, vector<8x32xf32>
    %c0_20 = arith.constant 0 : index
    %c0_21 = arith.constant 0 : index
    %36 = vector.load %arg6[%c0_20, %c0_21] : memref<8x32xf32, #tpu.memory_space<vmem>>, vector<8x32xf32>
    %37 = arith.index_cast %c1_i32 : i32 to index
    %c0_22 = arith.constant 0 : index
    %c0_23 = arith.constant 0 : index
    %38 = vector.load %arg2[%37, %c0_22, %c0_23] : memref<8x8x128xf32, #tpu.memory_space<vmem>>, vector<1x8x128xf32>
    %39 = vector.shape_cast %38 : vector<1x8x128xf32> to vector<8x128xf32>
    %c0_24 = arith.constant 0 : index
    %c0_25 = arith.constant 0 : index
    %40 = vector.load %arg3[%c0_24, %c0_25] : memref<32x128xf32, #tpu.memory_space<vmem>>, vector<32x128xf32>
    %cst_26 = arith.constant dense<0.000000e+00> : vector<8x128xf32>
    %41 = tpu.matmul %35, %40, %cst_26 {dimension_numbers = #tpu.dot_dimension_numbers<[1], [0], [0], [1], [0, 0, 1, 1], [], []>} : vector<8x32xf32>, vector<32x128xf32>, vector<8x128xf32> -> vector<8x128xf32>
    %42 = arith.addf %39, %41 : vector<8x128xf32>
    %43 = vector.extract_strided_slice %42 {offsets = [0, 0], sizes = [8, 96], strides = [1, 1]} : vector<8x128xf32> to vector<8x96xf32>
    %cst_27 = arith.constant 5.000000e-01 : f32
    %44 = vector.broadcast %cst_27 : f32 to vector<8x96xf32>
    %45 = arith.mulf %44, %43 : vector<8x96xf32>
    %46 = math.tanh %45 : vector<8x96xf32>
    %cst_28 = arith.constant 5.000000e-01 : f32
    %47 = vector.broadcast %cst_28 : f32 to vector<8x96xf32>
    %48 = arith.mulf %47, %46 : vector<8x96xf32>
    %cst_29 = arith.constant 5.000000e-01 : f32
    %49 = vector.broadcast %cst_29 : f32 to vector<8x96xf32>
    %50 = arith.addf %48, %49 : vector<8x96xf32>
    %51 = vector.extract_strided_slice %42 {offsets = [0, 96], sizes = [8, 32], strides = [1, 1]} : vector<8x128xf32> to vector<8x32xf32>
    %52 = math.tanh %51 : vector<8x32xf32>
    %53 = vector.extract_strided_slice %50 {offsets = [0, 0], sizes = [8, 32], strides = [1, 1]} : vector<8x96xf32> to vector<8x32xf32>
    %54 = vector.extract_strided_slice %50 {offsets = [0, 32], sizes = [8, 32], strides = [1, 1]} : vector<8x96xf32> to vector<8x32xf32>
    %55 = vector.extract_strided_slice %50 {offsets = [0, 64], sizes = [8, 32], strides = [1, 1]} : vector<8x96xf32> to vector<8x32xf32>
    %56 = arith.mulf %54, %36 : vector<8x32xf32>
    %57 = arith.mulf %53, %52 : vector<8x32xf32>
    %58 = arith.addf %56, %57 : vector<8x32xf32>
    %59 = math.tanh %58 : vector<8x32xf32>
    %60 = arith.mulf %55, %59 : vector<8x32xf32>
    %c0_30 = arith.constant 0 : index
    %c0_31 = arith.constant 0 : index
    %61 = vector.load %arg6[%c0_30, %c0_31] : memref<8x32xf32, #tpu.memory_space<vmem>>, vector<8x32xf32>
    tpu.vector_store %arg6[%c0_30, %c0_31], %58 {strides = array<i32>} : memref<8x32xf32, #tpu.memory_space<vmem>>, vector<8x32xf32>,
    %c0_32 = arith.constant 0 : index
    %c0_33 = arith.constant 0 : index
    %62 = vector.load %arg5[%c0_32, %c0_33] : memref<8x32xf32, #tpu.memory_space<vmem>>, vector<8x32xf32>
    tpu.vector_store %arg5[%c0_32, %c0_33], %60 {strides = array<i32>} : memref<8x32xf32, #tpu.memory_space<vmem>>, vector<8x32xf32>,
    %63 = arith.index_cast %c1_i32 : i32 to index
    %c0_34 = arith.constant 0 : index
    %c0_35 = arith.constant 0 : index
    %64 = vector.load %arg4[%63, %c0_34, %c0_35] : memref<8x8x32xf32, #tpu.memory_space<vmem>>, vector<1x8x32xf32>
    %65 = vector.shape_cast %64 : vector<1x8x32xf32> to vector<8x32xf32>
    %66 = vector.shape_cast %60 : vector<8x32xf32> to vector<1x8x32xf32>
    tpu.vector_store %arg4[%63, %c0_34, %c0_35], %66 {strides = array<i32>} : memref<8x8x32xf32, #tpu.memory_space<vmem>>, vector<1x8x32xf32>,
    %c2_i32 = arith.constant 2 : i32
    %c0_36 = arith.constant 0 : index
    %c0_37 = arith.constant 0 : index
    %67 = vector.load %arg5[%c0_36, %c0_37] : memref<8x32xf32, #tpu.memory_space<vmem>>, vector<8x32xf32>
    %c0_38 = arith.constant 0 : index
    %c0_39 = arith.constant 0 : index
    %68 = vector.load %arg6[%c0_38, %c0_39] : memref<8x32xf32, #tpu.memory_space<vmem>>, vector<8x32xf32>
    %69 = arith.index_cast %c2_i32 : i32 to index
    %c0_40 = arith.constant 0 : index
    %c0_41 = arith.constant 0 : index
    %70 = vector.load %arg2[%69, %c0_40, %c0_41] : memref<8x8x128xf32, #tpu.memory_space<vmem>>, vector<1x8x128xf32>
    %71 = vector.shape_cast %70 : vector<1x8x128xf32> to vector<8x128xf32>
    %c0_42 = arith.constant 0 : index
    %c0_43 = arith.constant 0 : index
    %72 = vector.load %arg3[%c0_42, %c0_43] : memref<32x128xf32, #tpu.memory_space<vmem>>, vector<32x128xf32>
    %cst_44 = arith.constant dense<0.000000e+00> : vector<8x128xf32>
    %73 = tpu.matmul %67, %72, %cst_44 {dimension_numbers = #tpu.dot_dimension_numbers<[1], [0], [0], [1], [0, 0, 1, 1], [], []>} : vector<8x32xf32>, vector<32x128xf32>, vector<8x128xf32> -> vector<8x128xf32>
    %74 = arith.addf %71, %73 : vector<8x128xf32>
    %75 = vector.extract_strided_slice %74 {offsets = [0, 0], sizes = [8, 96], strides = [1, 1]} : vector<8x128xf32> to vector<8x96xf32>
    %cst_45 = arith.constant 5.000000e-01 : f32
    %76 = vector.broadcast %cst_45 : f32 to vector<8x96xf32>
    %77 = arith.mulf %76, %75 : vector<8x96xf32>
    %78 = math.tanh %77 : vector<8x96xf32>
    %cst_46 = arith.constant 5.000000e-01 : f32
    %79 = vector.broadcast %cst_46 : f32 to vector<8x96xf32>
    %80 = arith.mulf %79, %78 : vector<8x96xf32>
    %cst_47 = arith.constant 5.000000e-01 : f32
    %81 = vector.broadcast %cst_47 : f32 to vector<8x96xf32>
    %82 = arith.addf %80, %81 : vector<8x96xf32>
    %83 = vector.extract_strided_slice %74 {offsets = [0, 96], sizes = [8, 32], strides = [1, 1]} : vector<8x128xf32> to vector<8x32xf32>
    %84 = math.tanh %83 : vector<8x32xf32>
    %85 = vector.extract_strided_slice %82 {offsets = [0, 0], sizes = [8, 32], strides = [1, 1]} : vector<8x96xf32> to vector<8x32xf32>
    %86 = vector.extract_strided_slice %82 {offsets = [0, 32], sizes = [8, 32], strides = [1, 1]} : vector<8x96xf32> to vector<8x32xf32>
    %87 = vector.extract_strided_slice %82 {offsets = [0, 64], sizes = [8, 32], strides = [1, 1]} : vector<8x96xf32> to vector<8x32xf32>
    %88 = arith.mulf %86, %68 : vector<8x32xf32>
    %89 = arith.mulf %85, %84 : vector<8x32xf32>
    %90 = arith.addf %88, %89 : vector<8x32xf32>
    %91 = math.tanh %90 : vector<8x32xf32>
    %92 = arith.mulf %87, %91 : vector<8x32xf32>
    %c0_48 = arith.constant 0 : index
    %c0_49 = arith.constant 0 : index
    %93 = vector.load %arg6[%c0_48, %c0_49] : memref<8x32xf32, #tpu.memory_space<vmem>>, vector<8x32xf32>
    tpu.vector_store %arg6[%c0_48, %c0_49], %90 {strides = array<i32>} : memref<8x32xf32, #tpu.memory_space<vmem>>, vector<8x32xf32>,
    %c0_50 = arith.constant 0 : index
    %c0_51 = arith.constant 0 : index
    %94 = vector.load %arg5[%c0_50, %c0_51] : memref<8x32xf32, #tpu.memory_space<vmem>>, vector<8x32xf32>
    tpu.vector_store %arg5[%c0_50, %c0_51], %92 {strides = array<i32>} : memref<8x32xf32, #tpu.memory_space<vmem>>, vector<8x32xf32>,
    %95 = arith.index_cast %c2_i32 : i32 to index
    %c0_52 = arith.constant 0 : index
    %c0_53 = arith.constant 0 : index
    %96 = vector.load %arg4[%95, %c0_52, %c0_53] : memref<8x8x32xf32, #tpu.memory_space<vmem>>, vector<1x8x32xf32>
    %97 = vector.shape_cast %96 : vector<1x8x32xf32> to vector<8x32xf32>
    %98 = vector.shape_cast %92 : vector<8x32xf32> to vector<1x8x32xf32>
    tpu.vector_store %arg4[%95, %c0_52, %c0_53], %98 {strides = array<i32>} : memref<8x8x32xf32, #tpu.memory_space<vmem>>, vector<1x8x32xf32>,
    %c3_i32 = arith.constant 3 : i32
    %c0_54 = arith.constant 0 : index
    %c0_55 = arith.constant 0 : index
    %99 = vector.load %arg5[%c0_54, %c0_55] : memref<8x32xf32, #tpu.memory_space<vmem>>, vector<8x32xf32>
    %c0_56 = arith.constant 0 : index
    %c0_57 = arith.constant 0 : index
    %100 = vector.load %arg6[%c0_56, %c0_57] : memref<8x32xf32, #tpu.memory_space<vmem>>, vector<8x32xf32>
    %101 = arith.index_cast %c3_i32 : i32 to index
    %c0_58 = arith.constant 0 : index
    %c0_59 = arith.constant 0 : index
    %102 = vector.load %arg2[%101, %c0_58, %c0_59] : memref<8x8x128xf32, #tpu.memory_space<vmem>>, vector<1x8x128xf32>
    %103 = vector.shape_cast %102 : vector<1x8x128xf32> to vector<8x128xf32>
    %c0_60 = arith.constant 0 : index
    %c0_61 = arith.constant 0 : index
    %104 = vector.load %arg3[%c0_60, %c0_61] : memref<32x128xf32, #tpu.memory_space<vmem>>, vector<32x128xf32>
    %cst_62 = arith.constant dense<0.000000e+00> : vector<8x128xf32>
    %105 = tpu.matmul %99, %104, %cst_62 {dimension_numbers = #tpu.dot_dimension_numbers<[1], [0], [0], [1], [0, 0, 1, 1], [], []>} : vector<8x32xf32>, vector<32x128xf32>, vector<8x128xf32> -> vector<8x128xf32>
    %106 = arith.addf %103, %105 : vector<8x128xf32>
    %107 = vector.extract_strided_slice %106 {offsets = [0, 0], sizes = [8, 96], strides = [1, 1]} : vector<8x128xf32> to vector<8x96xf32>
    %cst_63 = arith.constant 5.000000e-01 : f32
    %108 = vector.broadcast %cst_63 : f32 to vector<8x96xf32>
    %109 = arith.mulf %108, %107 : vector<8x96xf32>
    %110 = math.tanh %109 : vector<8x96xf32>
    %cst_64 = arith.constant 5.000000e-01 : f32
    %111 = vector.broadcast %cst_64 : f32 to vector<8x96xf32>
    %112 = arith.mulf %111, %110 : vector<8x96xf32>
    %cst_65 = arith.constant 5.000000e-01 : f32
    %113 = vector.broadcast %cst_65 : f32 to vector<8x96xf32>
    %114 = arith.addf %112, %113 : vector<8x96xf32>
    %115 = vector.extract_strided_slice %106 {offsets = [0, 96], sizes = [8, 32], strides = [1, 1]} : vector<8x128xf32> to vector<8x32xf32>
    %116 = math.tanh %115 : vector<8x32xf32>
    %117 = vector.extract_strided_slice %114 {offsets = [0, 0], sizes = [8, 32], strides = [1, 1]} : vector<8x96xf32> to vector<8x32xf32>
    %118 = vector.extract_strided_slice %114 {offsets = [0, 32], sizes = [8, 32], strides = [1, 1]} : vector<8x96xf32> to vector<8x32xf32>
    %119 = vector.extract_strided_slice %114 {offsets = [0, 64], sizes = [8, 32], strides = [1, 1]} : vector<8x96xf32> to vector<8x32xf32>
    %120 = arith.mulf %118, %100 : vector<8x32xf32>
    %121 = arith.mulf %117, %116 : vector<8x32xf32>
    %122 = arith.addf %120, %121 : vector<8x32xf32>
    %123 = math.tanh %122 : vector<8x32xf32>
    %124 = arith.mulf %119, %123 : vector<8x32xf32>
    %c0_66 = arith.constant 0 : index
    %c0_67 = arith.constant 0 : index
    %125 = vector.load %arg6[%c0_66, %c0_67] : memref<8x32xf32, #tpu.memory_space<vmem>>, vector<8x32xf32>
    tpu.vector_store %arg6[%c0_66, %c0_67], %122 {strides = array<i32>} : memref<8x32xf32, #tpu.memory_space<vmem>>, vector<8x32xf32>,
    %c0_68 = arith.constant 0 : index
    %c0_69 = arith.constant 0 : index
    %126 = vector.load %arg5[%c0_68, %c0_69] : memref<8x32xf32, #tpu.memory_space<vmem>>, vector<8x32xf32>
    tpu.vector_store %arg5[%c0_68, %c0_69], %124 {strides = array<i32>} : memref<8x32xf32, #tpu.memory_space<vmem>>, vector<8x32xf32>,
    %127 = arith.index_cast %c3_i32 : i32 to index
    %c0_70 = arith.constant 0 : index
    %c0_71 = arith.constant 0 : index
    %128 = vector.load %arg4[%127, %c0_70, %c0_71] : memref<8x8x32xf32, #tpu.memory_space<vmem>>, vector<1x8x32xf32>
    %129 = vector.shape_cast %128 : vector<1x8x32xf32> to vector<8x32xf32>
    %130 = vector.shape_cast %124 : vector<8x32xf32> to vector<1x8x32xf32>
    tpu.vector_store %arg4[%127, %c0_70, %c0_71], %130 {strides = array<i32>} : memref<8x8x32xf32, #tpu.memory_space<vmem>>, vector<1x8x32xf32>,
    %c4_i32 = arith.constant 4 : i32
    %c0_72 = arith.constant 0 : index
    %c0_73 = arith.constant 0 : index
    %131 = vector.load %arg5[%c0_72, %c0_73] : memref<8x32xf32, #tpu.memory_space<vmem>>, vector<8x32xf32>
    %c0_74 = arith.constant 0 : index
    %c0_75 = arith.constant 0 : index
    %132 = vector.load %arg6[%c0_74, %c0_75] : memref<8x32xf32, #tpu.memory_space<vmem>>, vector<8x32xf32>
    %133 = arith.index_cast %c4_i32 : i32 to index
    %c0_76 = arith.constant 0 : index
    %c0_77 = arith.constant 0 : index
    %134 = vector.load %arg2[%133, %c0_76, %c0_77] : memref<8x8x128xf32, #tpu.memory_space<vmem>>, vector<1x8x128xf32>
    %135 = vector.shape_cast %134 : vector<1x8x128xf32> to vector<8x128xf32>
    %c0_78 = arith.constant 0 : index
    %c0_79 = arith.constant 0 : index
    %136 = vector.load %arg3[%c0_78, %c0_79] : memref<32x128xf32, #tpu.memory_space<vmem>>, vector<32x128xf32>
    %cst_80 = arith.constant dense<0.000000e+00> : vector<8x128xf32>
    %137 = tpu.matmul %131, %136, %cst_80 {dimension_numbers = #tpu.dot_dimension_numbers<[1], [0], [0], [1], [0, 0, 1, 1], [], []>} : vector<8x32xf32>, vector<32x128xf32>, vector<8x128xf32> -> vector<8x128xf32>
    %138 = arith.addf %135, %137 : vector<8x128xf32>
    %139 = vector.extract_strided_slice %138 {offsets = [0, 0], sizes = [8, 96], strides = [1, 1]} : vector<8x128xf32> to vector<8x96xf32>
    %cst_81 = arith.constant 5.000000e-01 : f32
    %140 = vector.broadcast %cst_81 : f32 to vector<8x96xf32>
    %141 = arith.mulf %140, %139 : vector<8x96xf32>
    %142 = math.tanh %141 : vector<8x96xf32>
    %cst_82 = arith.constant 5.000000e-01 : f32
    %143 = vector.broadcast %cst_82 : f32 to vector<8x96xf32>
    %144 = arith.mulf %143, %142 : vector<8x96xf32>
    %cst_83 = arith.constant 5.000000e-01 : f32
    %145 = vector.broadcast %cst_83 : f32 to vector<8x96xf32>
    %146 = arith.addf %144, %145 : vector<8x96xf32>
    %147 = vector.extract_strided_slice %138 {offsets = [0, 96], sizes = [8, 32], strides = [1, 1]} : vector<8x128xf32> to vector<8x32xf32>
    %148 = math.tanh %147 : vector<8x32xf32>
    %149 = vector.extract_strided_slice %146 {offsets = [0, 0], sizes = [8, 32], strides = [1, 1]} : vector<8x96xf32> to vector<8x32xf32>
    %150 = vector.extract_strided_slice %146 {offsets = [0, 32], sizes = [8, 32], strides = [1, 1]} : vector<8x96xf32> to vector<8x32xf32>
    %151 = vector.extract_strided_slice %146 {offsets = [0, 64], sizes = [8, 32], strides = [1, 1]} : vector<8x96xf32> to vector<8x32xf32>
    %152 = arith.mulf %150, %132 : vector<8x32xf32>
    %153 = arith.mulf %149, %148 : vector<8x32xf32>
    %154 = arith.addf %152, %153 : vector<8x32xf32>
    %155 = math.tanh %154 : vector<8x32xf32>
    %156 = arith.mulf %151, %155 : vector<8x32xf32>
    %c0_84 = arith.constant 0 : index
    %c0_85 = arith.constant 0 : index
    %157 = vector.load %arg6[%c0_84, %c0_85] : memref<8x32xf32, #tpu.memory_space<vmem>>, vector<8x32xf32>
    tpu.vector_store %arg6[%c0_84, %c0_85], %154 {strides = array<i32>} : memref<8x32xf32, #tpu.memory_space<vmem>>, vector<8x32xf32>,
    %c0_86 = arith.constant 0 : index
    %c0_87 = arith.constant 0 : index
    %158 = vector.load %arg5[%c0_86, %c0_87] : memref<8x32xf32, #tpu.memory_space<vmem>>, vector<8x32xf32>
    tpu.vector_store %arg5[%c0_86, %c0_87], %156 {strides = array<i32>} : memref<8x32xf32, #tpu.memory_space<vmem>>, vector<8x32xf32>,
    %159 = arith.index_cast %c4_i32 : i32 to index
    %c0_88 = arith.constant 0 : index
    %c0_89 = arith.constant 0 : index
    %160 = vector.load %arg4[%159, %c0_88, %c0_89] : memref<8x8x32xf32, #tpu.memory_space<vmem>>, vector<1x8x32xf32>
    %161 = vector.shape_cast %160 : vector<1x8x32xf32> to vector<8x32xf32>
    %162 = vector.shape_cast %156 : vector<8x32xf32> to vector<1x8x32xf32>
    tpu.vector_store %arg4[%159, %c0_88, %c0_89], %162 {strides = array<i32>} : memref<8x8x32xf32, #tpu.memory_space<vmem>>, vector<1x8x32xf32>,
    %c5_i32 = arith.constant 5 : i32
    %c0_90 = arith.constant 0 : index
    %c0_91 = arith.constant 0 : index
    %163 = vector.load %arg5[%c0_90, %c0_91] : memref<8x32xf32, #tpu.memory_space<vmem>>, vector<8x32xf32>
    %c0_92 = arith.constant 0 : index
    %c0_93 = arith.constant 0 : index
    %164 = vector.load %arg6[%c0_92, %c0_93] : memref<8x32xf32, #tpu.memory_space<vmem>>, vector<8x32xf32>
    %165 = arith.index_cast %c5_i32 : i32 to index
    %c0_94 = arith.constant 0 : index
    %c0_95 = arith.constant 0 : index
    %166 = vector.load %arg2[%165, %c0_94, %c0_95] : memref<8x8x128xf32, #tpu.memory_space<vmem>>, vector<1x8x128xf32>
    %167 = vector.shape_cast %166 : vector<1x8x128xf32> to vector<8x128xf32>
    %c0_96 = arith.constant 0 : index
    %c0_97 = arith.constant 0 : index
    %168 = vector.load %arg3[%c0_96, %c0_97] : memref<32x128xf32, #tpu.memory_space<vmem>>, vector<32x128xf32>
    %cst_98 = arith.constant dense<0.000000e+00> : vector<8x128xf32>
    %169 = tpu.matmul %163, %168, %cst_98 {dimension_numbers = #tpu.dot_dimension_numbers<[1], [0], [0], [1], [0, 0, 1, 1], [], []>} : vector<8x32xf32>, vector<32x128xf32>, vector<8x128xf32> -> vector<8x128xf32>
    %170 = arith.addf %167, %169 : vector<8x128xf32>
    %171 = vector.extract_strided_slice %170 {offsets = [0, 0], sizes = [8, 96], strides = [1, 1]} : vector<8x128xf32> to vector<8x96xf32>
    %cst_99 = arith.constant 5.000000e-01 : f32
    %172 = vector.broadcast %cst_99 : f32 to vector<8x96xf32>
    %173 = arith.mulf %172, %171 : vector<8x96xf32>
    %174 = math.tanh %173 : vector<8x96xf32>
    %cst_100 = arith.constant 5.000000e-01 : f32
    %175 = vector.broadcast %cst_100 : f32 to vector<8x96xf32>
    %176 = arith.mulf %175, %174 : vector<8x96xf32>
    %cst_101 = arith.constant 5.000000e-01 : f32
    %177 = vector.broadcast %cst_101 : f32 to vector<8x96xf32>
    %178 = arith.addf %176, %177 : vector<8x96xf32>
    %179 = vector.extract_strided_slice %170 {offsets = [0, 96], sizes = [8, 32], strides = [1, 1]} : vector<8x128xf32> to vector<8x32xf32>
    %180 = math.tanh %179 : vector<8x32xf32>
    %181 = vector.extract_strided_slice %178 {offsets = [0, 0], sizes = [8, 32], strides = [1, 1]} : vector<8x96xf32> to vector<8x32xf32>
    %182 = vector.extract_strided_slice %178 {offsets = [0, 32], sizes = [8, 32], strides = [1, 1]} : vector<8x96xf32> to vector<8x32xf32>
    %183 = vector.extract_strided_slice %178 {offsets = [0, 64], sizes = [8, 32], strides = [1, 1]} : vector<8x96xf32> to vector<8x32xf32>
    %184 = arith.mulf %182, %164 : vector<8x32xf32>
    %185 = arith.mulf %181, %180 : vector<8x32xf32>
    %186 = arith.addf %184, %185 : vector<8x32xf32>
    %187 = math.tanh %186 : vector<8x32xf32>
    %188 = arith.mulf %183, %187 : vector<8x32xf32>
    %c0_102 = arith.constant 0 : index
    %c0_103 = arith.constant 0 : index
    %189 = vector.load %arg6[%c0_102, %c0_103] : memref<8x32xf32, #tpu.memory_space<vmem>>, vector<8x32xf32>
    tpu.vector_store %arg6[%c0_102, %c0_103], %186 {strides = array<i32>} : memref<8x32xf32, #tpu.memory_space<vmem>>, vector<8x32xf32>,
    %c0_104 = arith.constant 0 : index
    %c0_105 = arith.constant 0 : index
    %190 = vector.load %arg5[%c0_104, %c0_105] : memref<8x32xf32, #tpu.memory_space<vmem>>, vector<8x32xf32>
    tpu.vector_store %arg5[%c0_104, %c0_105], %188 {strides = array<i32>} : memref<8x32xf32, #tpu.memory_space<vmem>>, vector<8x32xf32>,
    %191 = arith.index_cast %c5_i32 : i32 to index
    %c0_106 = arith.constant 0 : index
    %c0_107 = arith.constant 0 : index
    %192 = vector.load %arg4[%191, %c0_106, %c0_107] : memref<8x8x32xf32, #tpu.memory_space<vmem>>, vector<1x8x32xf32>
    %193 = vector.shape_cast %192 : vector<1x8x32xf32> to vector<8x32xf32>
    %194 = vector.shape_cast %188 : vector<8x32xf32> to vector<1x8x32xf32>
    tpu.vector_store %arg4[%191, %c0_106, %c0_107], %194 {strides = array<i32>} : memref<8x8x32xf32, #tpu.memory_space<vmem>>, vector<1x8x32xf32>,
    %c6_i32 = arith.constant 6 : i32
    %c0_108 = arith.constant 0 : index
    %c0_109 = arith.constant 0 : index
    %195 = vector.load %arg5[%c0_108, %c0_109] : memref<8x32xf32, #tpu.memory_space<vmem>>, vector<8x32xf32>
    %c0_110 = arith.constant 0 : index
    %c0_111 = arith.constant 0 : index
    %196 = vector.load %arg6[%c0_110, %c0_111] : memref<8x32xf32, #tpu.memory_space<vmem>>, vector<8x32xf32>
    %197 = arith.index_cast %c6_i32 : i32 to index
    %c0_112 = arith.constant 0 : index
    %c0_113 = arith.constant 0 : index
    %198 = vector.load %arg2[%197, %c0_112, %c0_113] : memref<8x8x128xf32, #tpu.memory_space<vmem>>, vector<1x8x128xf32>
    %199 = vector.shape_cast %198 : vector<1x8x128xf32> to vector<8x128xf32>
    %c0_114 = arith.constant 0 : index
    %c0_115 = arith.constant 0 : index
    %200 = vector.load %arg3[%c0_114, %c0_115] : memref<32x128xf32, #tpu.memory_space<vmem>>, vector<32x128xf32>
    %cst_116 = arith.constant dense<0.000000e+00> : vector<8x128xf32>
    %201 = tpu.matmul %195, %200, %cst_116 {dimension_numbers = #tpu.dot_dimension_numbers<[1], [0], [0], [1], [0, 0, 1, 1], [], []>} : vector<8x32xf32>, vector<32x128xf32>, vector<8x128xf32> -> vector<8x128xf32>
    %202 = arith.addf %199, %201 : vector<8x128xf32>
    %203 = vector.extract_strided_slice %202 {offsets = [0, 0], sizes = [8, 96], strides = [1, 1]} : vector<8x128xf32> to vector<8x96xf32>
    %cst_117 = arith.constant 5.000000e-01 : f32
    %204 = vector.broadcast %cst_117 : f32 to vector<8x96xf32>
    %205 = arith.mulf %204, %203 : vector<8x96xf32>
    %206 = math.tanh %205 : vector<8x96xf32>
    %cst_118 = arith.constant 5.000000e-01 : f32
    %207 = vector.broadcast %cst_118 : f32 to vector<8x96xf32>
    %208 = arith.mulf %207, %206 : vector<8x96xf32>
    %cst_119 = arith.constant 5.000000e-01 : f32
    %209 = vector.broadcast %cst_119 : f32 to vector<8x96xf32>
    %210 = arith.addf %208, %209 : vector<8x96xf32>
    %211 = vector.extract_strided_slice %202 {offsets = [0, 96], sizes = [8, 32], strides = [1, 1]} : vector<8x128xf32> to vector<8x32xf32>
    %212 = math.tanh %211 : vector<8x32xf32>
    %213 = vector.extract_strided_slice %210 {offsets = [0, 0], sizes = [8, 32], strides = [1, 1]} : vector<8x96xf32> to vector<8x32xf32>
    %214 = vector.extract_strided_slice %210 {offsets = [0, 32], sizes = [8, 32], strides = [1, 1]} : vector<8x96xf32> to vector<8x32xf32>
    %215 = vector.extract_strided_slice %210 {offsets = [0, 64], sizes = [8, 32], strides = [1, 1]} : vector<8x96xf32> to vector<8x32xf32>
    %216 = arith.mulf %214, %196 : vector<8x32xf32>
    %217 = arith.mulf %213, %212 : vector<8x32xf32>
    %218 = arith.addf %216, %217 : vector<8x32xf32>
    %219 = math.tanh %218 : vector<8x32xf32>
    %220 = arith.mulf %215, %219 : vector<8x32xf32>
    %c0_120 = arith.constant 0 : index
    %c0_121 = arith.constant 0 : index
    %221 = vector.load %arg6[%c0_120, %c0_121] : memref<8x32xf32, #tpu.memory_space<vmem>>, vector<8x32xf32>
    tpu.vector_store %arg6[%c0_120, %c0_121], %218 {strides = array<i32>} : memref<8x32xf32, #tpu.memory_space<vmem>>, vector<8x32xf32>,
    %c0_122 = arith.constant 0 : index
    %c0_123 = arith.constant 0 : index
    %222 = vector.load %arg5[%c0_122, %c0_123] : memref<8x32xf32, #tpu.memory_space<vmem>>, vector<8x32xf32>
    tpu.vector_store %arg5[%c0_122, %c0_123], %220 {strides = array<i32>} : memref<8x32xf32, #tpu.memory_space<vmem>>, vector<8x32xf32>,
    %223 = arith.index_cast %c6_i32 : i32 to index
    %c0_124 = arith.constant 0 : index
    %c0_125 = arith.constant 0 : index
    %224 = vector.load %arg4[%223, %c0_124, %c0_125] : memref<8x8x32xf32, #tpu.memory_space<vmem>>, vector<1x8x32xf32>
    %225 = vector.shape_cast %224 : vector<1x8x32xf32> to vector<8x32xf32>
    %226 = vector.shape_cast %220 : vector<8x32xf32> to vector<1x8x32xf32>
    tpu.vector_store %arg4[%223, %c0_124, %c0_125], %226 {strides = array<i32>} : memref<8x8x32xf32, #tpu.memory_space<vmem>>, vector<1x8x32xf32>,
    %c7_i32 = arith.constant 7 : i32
    %c0_126 = arith.constant 0 : index
    %c0_127 = arith.constant 0 : index
    %227 = vector.load %arg5[%c0_126, %c0_127] : memref<8x32xf32, #tpu.memory_space<vmem>>, vector<8x32xf32>
    %c0_128 = arith.constant 0 : index
    %c0_129 = arith.constant 0 : index
    %228 = vector.load %arg6[%c0_128, %c0_129] : memref<8x32xf32, #tpu.memory_space<vmem>>, vector<8x32xf32>
    %229 = arith.index_cast %c7_i32 : i32 to index
    %c0_130 = arith.constant 0 : index
    %c0_131 = arith.constant 0 : index
    %230 = vector.load %arg2[%229, %c0_130, %c0_131] : memref<8x8x128xf32, #tpu.memory_space<vmem>>, vector<1x8x128xf32>
    %231 = vector.shape_cast %230 : vector<1x8x128xf32> to vector<8x128xf32>
    %c0_132 = arith.constant 0 : index
    %c0_133 = arith.constant 0 : index
    %232 = vector.load %arg3[%c0_132, %c0_133] : memref<32x128xf32, #tpu.memory_space<vmem>>, vector<32x128xf32>
    %cst_134 = arith.constant dense<0.000000e+00> : vector<8x128xf32>
    %233 = tpu.matmul %227, %232, %cst_134 {dimension_numbers = #tpu.dot_dimension_numbers<[1], [0], [0], [1], [0, 0, 1, 1], [], []>} : vector<8x32xf32>, vector<32x128xf32>, vector<8x128xf32> -> vector<8x128xf32>
    %234 = arith.addf %231, %233 : vector<8x128xf32>
    %235 = vector.extract_strided_slice %234 {offsets = [0, 0], sizes = [8, 96], strides = [1, 1]} : vector<8x128xf32> to vector<8x96xf32>
    %cst_135 = arith.constant 5.000000e-01 : f32
    %236 = vector.broadcast %cst_135 : f32 to vector<8x96xf32>
    %237 = arith.mulf %236, %235 : vector<8x96xf32>
    %238 = math.tanh %237 : vector<8x96xf32>
    %cst_136 = arith.constant 5.000000e-01 : f32
    %239 = vector.broadcast %cst_136 : f32 to vector<8x96xf32>
    %240 = arith.mulf %239, %238 : vector<8x96xf32>
    %cst_137 = arith.constant 5.000000e-01 : f32
    %241 = vector.broadcast %cst_137 : f32 to vector<8x96xf32>
    %242 = arith.addf %240, %241 : vector<8x96xf32>
    %243 = vector.extract_strided_slice %234 {offsets = [0, 96], sizes = [8, 32], strides = [1, 1]} : vector<8x128xf32> to vector<8x32xf32>
    %244 = math.tanh %243 : vector<8x32xf32>
    %245 = vector.extract_strided_slice %242 {offsets = [0, 0], sizes = [8, 32], strides = [1, 1]} : vector<8x96xf32> to vector<8x32xf32>
    %246 = vector.extract_strided_slice %242 {offsets = [0, 32], sizes = [8, 32], strides = [1, 1]} : vector<8x96xf32> to vector<8x32xf32>
    %247 = vector.extract_strided_slice %242 {offsets = [0, 64], sizes = [8, 32], strides = [1, 1]} : vector<8x96xf32> to vector<8x32xf32>
    %248 = arith.mulf %246, %228 : vector<8x32xf32>
    %249 = arith.mulf %245, %244 : vector<8x32xf32>
    %250 = arith.addf %248, %249 : vector<8x32xf32>
    %251 = math.tanh %250 : vector<8x32xf32>
    %252 = arith.mulf %247, %251 : vector<8x32xf32>
    %c0_138 = arith.constant 0 : index
    %c0_139 = arith.constant 0 : index
    %253 = vector.load %arg6[%c0_138, %c0_139] : memref<8x32xf32, #tpu.memory_space<vmem>>, vector<8x32xf32>
    tpu.vector_store %arg6[%c0_138, %c0_139], %250 {strides = array<i32>} : memref<8x32xf32, #tpu.memory_space<vmem>>, vector<8x32xf32>,
    %c0_140 = arith.constant 0 : index
    %c0_141 = arith.constant 0 : index
    %254 = vector.load %arg5[%c0_140, %c0_141] : memref<8x32xf32, #tpu.memory_space<vmem>>, vector<8x32xf32>
    tpu.vector_store %arg5[%c0_140, %c0_141], %252 {strides = array<i32>} : memref<8x32xf32, #tpu.memory_space<vmem>>, vector<8x32xf32>,
    %255 = arith.index_cast %c7_i32 : i32 to index
    %c0_142 = arith.constant 0 : index
    %c0_143 = arith.constant 0 : index
    %256 = vector.load %arg4[%255, %c0_142, %c0_143] : memref<8x8x32xf32, #tpu.memory_space<vmem>>, vector<1x8x32xf32>
    %257 = vector.shape_cast %256 : vector<1x8x32xf32> to vector<8x32xf32>
    %258 = vector.shape_cast %252 : vector<8x32xf32> to vector<1x8x32xf32>
    tpu.vector_store %arg4[%255, %c0_142, %c0_143], %258 {strides = array<i32>} : memref<8x8x32xf32, #tpu.memory_space<vmem>>, vector<1x8x32xf32>,
    %c8_i32 = arith.constant 8 : i32
    return
  }
  func.func @transform_0(%arg0: i32, %arg1: i32) -> (i32, i32, i32) {
    %c0_i32 = arith.constant 0 : i32
    %c0_i32_0 = arith.constant 0 : i32
    return %arg1, %arg0, %c0_i32 : i32, i32, i32
  }
  func.func @transform_1(%arg0: i32, %arg1: i32) -> (i32, i32) {
    %c0_i32 = arith.constant 0 : i32
    %c0_i32_0 = arith.constant 0 : i32
    %c0_i32_1 = arith.constant 0 : i32
    return %c0_i32, %c0_i32_0 : i32, i32
  }
  func.func @transform_2(%arg0: i32, %arg1: i32) -> (i32, i32, i32) {
    %c0_i32 = arith.constant 0 : i32
    %c0_i32_0 = arith.constant 0 : i32
    return %arg1, %arg0, %c0_i32 : i32, i32, i32
  }
}

</mosaic_0001>

<llo_original>
// kernel: single_rnn_forward.1
$region0: #{single_rnn_forward.1}
  #allocation0 [shape = 'u32[]', space=smem, size = 0x4, offset = 0x4, fixed_abs, tag = 'smem constant byte address 0x4 - core index']
  #allocation1 [shape = 'u32[72,128]{1,0:T(1,128)}', space=vmem, size = 0x9000, scoped, tag = 'internal scratch']
  #allocation2 [shape = 'f32[8,32]{1,0:T(8,128)}', space=vmem, size = 0x1000, scoped, tag = 'scratch operand']
  #allocation3 [shape = 'f32[8,32]{1,0:T(8,128)}', space=vmem, size = 0x1000, scoped, tag = 'scratch operand']
  %s0 = inlined_call_operand.vmem [shape: f32[8,8,128], index: 0, kind: input, shape index: {}]
  %s1 = inlined_call_operand.vmem [shape: f32[32,128], index: 1, kind: input, shape index: {}]
  %s2 = inlined_call_operand.vmem [shape: f32[8,8,32], index: 2, kind: output, shape index: {}]
  %s3 = sld [smem:[#allocation0]]
  $region22: #{single_rnn_forward.1} parent=0
    _
  %s5 = ssub.s32 1, %s3
  %s6 = scalar_select 0, %s5, %s3
  // Predicated region
  $region2: #{single_rnn_forward.1} parent=0 // pred_check
    _
  $region3: #{single_rnn_forward.1} parent=0 // pred_check_branch
    %8 = sbr.rel (0) target = $region5
  $region4: #{single_rnn_forward.1} parent=0 // pred_region
    _
  $region5: #{single_rnn_forward.1} parent=0 // pred_fallthru
    _
  // Predicated region
  $region6: #{single_rnn_forward.1} parent=0 // pred_check
    _
  $region7: #{single_rnn_forward.1} parent=0 // pred_check_branch
    %10 = sbr.rel (0) target = $region9
  $region8: #{single_rnn_forward.1} parent=0 // pred_region
    _
  $region9: #{single_rnn_forward.1} parent=0 // pred_fallthru
    _
  %p11 = scmp.eq.s32.totalorder 0, 0
  // Predicated region
  $region10: #{single_rnn_forward.1} parent=0 // pred_check
    %p12 = pneg %p11
  $region11: #{single_rnn_forward.1} parent=0 // pred_check_branch
    %14 = sbr.rel (%p12) target = $region13
  $region12: #{single_rnn_forward.1} parent=0 // pred_region
    %vm15 = vcmask 261120
    %16 = vst.msk [vmem:[#allocation2] sm:$0xff] %vm15, 0.0
    %17 = vst.msk [vmem:[#allocation3] sm:$0xff] %vm15, 0.0
  $region13: #{single_rnn_forward.1} parent=0 // pred_fallthru
    _
  %v18 = vld [vmem:[#allocation2] sm:$0xff]
  %v19 = vld [vmem:[#allocation3] sm:$0xff]
  %v20 = vld [vmem:[%s0] sm:$0xff]
  %v21 = vld [vmem:[%s1] sm:$0xff]
  %v22 = vld [vmem:[%s1 + $0x8] sm:$0xff]
  %v23 = vld [vmem:[%s1 + $0x10] sm:$0xff]
  %v24 = vld [vmem:[%s1 + $0x18] sm:$0xff]
  %vm25 = vcmask 261120
  %v27 = vsel %vm25, %v18, 0
  %29 = vmatpush.msra.mxu0 0.0
  %30 = vmatpush.msra.mxu0 0.0
  %31 = vmatpush.msra.mxu0 0.0
  %32 = vmatpush.msra.mxu0 0.0
  %33 = vmatpush.msra.mxu0 0.0
  %34 = vmatpush.msra.mxu0 0.0
  %35 = vmatpush.msra.mxu0 0.0
  %36 = vmatpush.msra.mxu0 0.0
  %37 = vmatpush.msra.mxu0 0.0
  %38 = vmatpush.msra.mxu0 0.0
  %39 = vmatpush.msra.mxu0 0.0
  %40 = vmatpush.msra.mxu0 0.0
  %41 = vmatpush.msra.mxu0 %v24
  %42 = vmatpush.msra.mxu0 %v23
  %43 = vmatpush.msra.mxu0 %v22
  %44 = vmatpush.msra.mxu0 %v21
  %45 = vmatmul.f32.gmra.mxu0 %v27
  %v46 = vpop.f32.mrf.mxu0
  %v47 = vadd.f32 0.0, %v46
  %48 = vdwg.mxu0
  %v49 = vadd.f32 %v20, %v47
  %v50 = vmul.f32 %v49, 0.5
  %v51 = vtanh.pop %v50
  %v52 = vmul.f32 %v51, 0.5
  %v53 = vadd.f32 %v52, 0.5
  %v54 = vtanh.pop %v49
  %56 = vrot.lane.b32.xlu0 %v19, 32
  %v57 = vpop.permute.xlu0 %56
  %v59 = vmul.f32 %v53, %v57
  %61 = vrot.lane.b32.xlu0 %v54, 32
  %v62 = vpop.permute.xlu0 %61
  %v64 = vmul.f32 %v53, %v62
  %66 = vrot.lane.b32.xlu0 %v64, 32
  %v67 = vpop.permute.xlu0 %66
  %v69 = vadd.f32 %v59, %v67
  %v70 = vtanh.pop %v69
  %72 = vrot.lane.b32.xlu0 %v70, 32
  %v73 = vpop.permute.xlu0 %72
  %v75 = vmul.f32 %v53, %v73
  %77 = vrot.lane.b32.xlu0 %v69, 96
  %v78 = vpop.permute.xlu0 %77
  %80 = vst.msk [vmem:[#allocation3] sm:$0xff] %vm25, %v78
  %82 = vrot.lane.b32.xlu0 %v75, 64
  %v83 = vpop.permute.xlu0 %82
  %85 = vst.msk [vmem:[#allocation2] sm:$0xff] %vm25, %v83
  %86 = vst.msk [vmem:[%s2] sm:$0xff] %vm25, %v83
  %v87 = vld [vmem:[#allocation2] sm:$0xff]
  %v88 = vld [vmem:[#allocation3] sm:$0xff]
  %s89 = scalar_lea.vmem %s0, 8
  %v90 = vld [vmem:[%s89] sm:$0xff]
  %v91 = vld [vmem:[%s1] sm:$0xff]
  %v92 = vld [vmem:[%s1 + $0x8] sm:$0xff]
  %v93 = vld [vmem:[%s1 + $0x10] sm:$0xff]
  %v94 = vld [vmem:[%s1 + $0x18] sm:$0xff]
  %v96 = vsel %vm25, %v87, 0
  %98 = vmatpush.msra.mxu0 0.0
  %99 = vmatpush.msra.mxu0 0.0
  %100 = vmatpush.msra.mxu0 0.0
  %101 = vmatpush.msra.mxu0 0.0
  %102 = vmatpush.msra.mxu0 0.0
  %103 = vmatpush.msra.mxu0 0.0
  %104 = vmatpush.msra.mxu0 0.0
  %105 = vmatpush.msra.mxu0 0.0
  %106 = vmatpush.msra.mxu0 0.0
  %107 = vmatpush.msra.mxu0 0.0
  %108 = vmatpush.msra.mxu0 0.0
  %109 = vmatpush.msra.mxu0 0.0
  %110 = vmatpush.msra.mxu0 %v94
  %111 = vmatpush.msra.mxu0 %v93
  %112 = vmatpush.msra.mxu0 %v92
  %113 = vmatpush.msra.mxu0 %v91
  %114 = vmatmul.f32.gmra.mxu0 %v96
  %v115 = vpop.f32.mrf.mxu0
  %v116 = vadd.f32 0.0, %v115
  %117 = vdwg.mxu0
  %v118 = vadd.f32 %v90, %v116
  %v119 = vmul.f32 %v118, 0.5
  %v120 = vtanh.pop %v119
  %v121 = vmul.f32 %v120, 0.5
  %v122 = vadd.f32 %v121, 0.5
  %v123 = vtanh.pop %v118
  %125 = vrot.lane.b32.xlu0 %v88, 32
  %v126 = vpop.permute.xlu0 %125
  %v128 = vmul.f32 %v122, %v126
  %130 = vrot.lane.b32.xlu0 %v123, 32
  %v131 = vpop.permute.xlu0 %130
  %v133 = vmul.f32 %v122, %v131
  %135 = vrot.lane.b32.xlu0 %v133, 32
  %v136 = vpop.permute.xlu0 %135
  %v138 = vadd.f32 %v128, %v136
  %v139 = vtanh.pop %v138
  %141 = vrot.lane.b32.xlu0 %v139, 32
  %v142 = vpop.permute.xlu0 %141
  %v144 = vmul.f32 %v122, %v142
  %146 = vrot.lane.b32.xlu0 %v138, 96
  %v147 = vpop.permute.xlu0 %146
  %149 = vst.msk [vmem:[#allocation3] sm:$0xff] %vm25, %v147
  %151 = vrot.lane.b32.xlu0 %v144, 64
  %v152 = vpop.permute.xlu0 %151
  %154 = vst.msk [vmem:[#allocation2] sm:$0xff] %vm25, %v152
  %s155 = scalar_lea.vmem %s2, 8
  %156 = vst.msk [vmem:[%s155] sm:$0xff] %vm25, %v152
  %v157 = vld [vmem:[#allocation2] sm:$0xff]
  %v158 = vld [vmem:[#allocation3] sm:$0xff]
  %s159 = scalar_lea.vmem %s0, 16
  %v160 = vld [vmem:[%s159] sm:$0xff]
  %v161 = vld [vmem:[%s1] sm:$0xff]
  %v162 = vld [vmem:[%s1 + $0x8] sm:$0xff]
  %v163 = vld [vmem:[%s1 + $0x10] sm:$0xff]
  %v164 = vld [vmem:[%s1 + $0x18] sm:$0xff]
  %v166 = vsel %vm25, %v157, 0
  %168 = vmatpush.msra.mxu0 0.0
  %169 = vmatpush.msra.mxu0 0.0
  %170 = vmatpush.msra.mxu0 0.0
  %171 = vmatpush.msra.mxu0 0.0
  %172 = vmatpush.msra.mxu0 0.0
  %173 = vmatpush.msra.mxu0 0.0
  %174 = vmatpush.msra.mxu0 0.0
  %175 = vmatpush.msra.mxu0 0.0
  %176 = vmatpush.msra.mxu0 0.0
  %177 = vmatpush.msra.mxu0 0.0
  %178 = vmatpush.msra.mxu0 0.0
  %179 = vmatpush.msra.mxu0 0.0
  %180 = vmatpush.msra.mxu0 %v164
  %181 = vmatpush.msra.mxu0 %v163
  %182 = vmatpush.msra.mxu0 %v162
  %183 = vmatpush.msra.mxu0 %v161
  %184 = vmatmul.f32.gmra.mxu0 %v166
  %v185 = vpop.f32.mrf.mxu0
  %v186 = vadd.f32 0.0, %v185
  %187 = vdwg.mxu0
  %v188 = vadd.f32 %v160, %v186
  %v189 = vmul.f32 %v188, 0.5
  %v190 = vtanh.pop %v189
  %v191 = vmul.f32 %v190, 0.5
  %v192 = vadd.f32 %v191, 0.5
  %v193 = vtanh.pop %v188
  %195 = vrot.lane.b32.xlu0 %v158, 32
  %v196 = vpop.permute.xlu0 %195
  %v198 = vmul.f32 %v192, %v196
  %200 = vrot.lane.b32.xlu0 %v193, 32
  %v201 = vpop.permute.xlu0 %200
  %v203 = vmul.f32 %v192, %v201
  %205 = vrot.lane.b32.xlu0 %v203, 32
  %v206 = vpop.permute.xlu0 %205
  %v208 = vadd.f32 %v198, %v206
  %v209 = vtanh.pop %v208
  %211 = vrot.lane.b32.xlu0 %v209, 32
  %v212 = vpop.permute.xlu0 %211
  %v214 = vmul.f32 %v192, %v212
  %216 = vrot.lane.b32.xlu0 %v208, 96
  %v217 = vpop.permute.xlu0 %216
  %219 = vst.msk [vmem:[#allocation3] sm:$0xff] %vm25, %v217
  %221 = vrot.lane.b32.xlu0 %v214, 64
  %v222 = vpop.permute.xlu0 %221
  %224 = vst.msk [vmem:[#allocation2] sm:$0xff] %vm25, %v222
  %s225 = scalar_lea.vmem %s2, 16
  %226 = vst.msk [vmem:[%s225] sm:$0xff] %vm25, %v222
  %v227 = vld [vmem:[#allocation2] sm:$0xff]
  %v228 = vld [vmem:[#allocation3] sm:$0xff]
  %s229 = scalar_lea.vmem %s0, 24
  %v230 = vld [vmem:[%s229] sm:$0xff]
  %v231 = vld [vmem:[%s1] sm:$0xff]
  %v232 = vld [vmem:[%s1 + $0x8] sm:$0xff]
  %v233 = vld [vmem:[%s1 + $0x10] sm:$0xff]
  %v234 = vld [vmem:[%s1 + $0x18] sm:$0xff]
  %v236 = vsel %vm25, %v227, 0
  %238 = vmatpush.msra.mxu0 0.0
  %239 = vmatpush.msra.mxu0 0.0
  %240 = vmatpush.msra.mxu0 0.0
  %241 = vmatpush.msra.mxu0 0.0
  %242 = vmatpush.msra.mxu0 0.0
  %243 = vmatpush.msra.mxu0 0.0
  %244 = vmatpush.msra.mxu0 0.0
  %245 = vmatpush.msra.mxu0 0.0
  %246 = vmatpush.msra.mxu0 0.0
  %247 = vmatpush.msra.mxu0 0.0
  %248 = vmatpush.msra.mxu0 0.0
  %249 = vmatpush.msra.mxu0 0.0
  %250 = vmatpush.msra.mxu0 %v234
  %251 = vmatpush.msra.mxu0 %v233
  %252 = vmatpush.msra.mxu0 %v232
  %253 = vmatpush.msra.mxu0 %v231
  %254 = vmatmul.f32.gmra.mxu0 %v236
  %v255 = vpop.f32.mrf.mxu0
  %v256 = vadd.f32 0.0, %v255
  %257 = vdwg.mxu0
  %v258 = vadd.f32 %v230, %v256
  %v259 = vmul.f32 %v258, 0.5
  %v260 = vtanh.pop %v259
  %v261 = vmul.f32 %v260, 0.5
  %v262 = vadd.f32 %v261, 0.5
  %v263 = vtanh.pop %v258
  %265 = vrot.lane.b32.xlu0 %v228, 32
  %v266 = vpop.permute.xlu0 %265
  %v268 = vmul.f32 %v262, %v266
  %270 = vrot.lane.b32.xlu0 %v263, 32
  %v271 = vpop.permute.xlu0 %270
  %v273 = vmul.f32 %v262, %v271
  %275 = vrot.lane.b32.xlu0 %v273, 32
  %v276 = vpop.permute.xlu0 %275
  %v278 = vadd.f32 %v268, %v276
  %v279 = vtanh.pop %v278
  %281 = vrot.lane.b32.xlu0 %v279, 32
  %v282 = vpop.permute.xlu0 %281
  %v284 = vmul.f32 %v262, %v282
  %286 = vrot.lane.b32.xlu0 %v278, 96
  %v287 = vpop.permute.xlu0 %286
  %289 = vst.msk [vmem:[#allocation3] sm:$0xff] %vm25, %v287
  %291 = vrot.lane.b32.xlu0 %v284, 64
  %v292 = vpop.permute.xlu0 %291
  %294 = vst.msk [vmem:[#allocation2] sm:$0xff] %vm25, %v292
  %s295 = scalar_lea.vmem %s2, 24
  %296 = vst.msk [vmem:[%s295] sm:$0xff] %vm25, %v292
  %v297 = vld [vmem:[#allocation2] sm:$0xff]
  %v298 = vld [vmem:[#allocation3] sm:$0xff]
  %s299 = scalar_lea.vmem %s0, 32
  %v300 = vld [vmem:[%s299] sm:$0xff]
  %v301 = vld [vmem:[%s1] sm:$0xff]
  %v302 = vld [vmem:[%s1 + $0x8] sm:$0xff]
  %v303 = vld [vmem:[%s1 + $0x10] sm:$0xff]
  %v304 = vld [vmem:[%s1 + $0x18] sm:$0xff]
  %v306 = vsel %vm25, %v297, 0
  %308 = vmatpush.msra.mxu0 0.0
  %309 = vmatpush.msra.mxu0 0.0
  %310 = vmatpush.msra.mxu0 0.0
  %311 = vmatpush.msra.mxu0 0.0
  %312 = vmatpush.msra.mxu0 0.0
  %313 = vmatpush.msra.mxu0 0.0
  %314 = vmatpush.msra.mxu0 0.0
  %315 = vmatpush.msra.mxu0 0.0
  %316 = vmatpush.msra.mxu0 0.0
  %317 = vmatpush.msra.mxu0 0.0
  %318 = vmatpush.msra.mxu0 0.0
  %319 = vmatpush.msra.mxu0 0.0
  %320 = vmatpush.msra.mxu0 %v304
  %321 = vmatpush.msra.mxu0 %v303
  %322 = vmatpush.msra.mxu0 %v302
  %323 = vmatpush.msra.mxu0 %v301
  %324 = vmatmul.f32.gmra.mxu0 %v306
  %v325 = vpop.f32.mrf.mxu0
  %v326 = vadd.f32 0.0, %v325
  %327 = vdwg.mxu0
  %v328 = vadd.f32 %v300, %v326
  %v329 = vmul.f32 %v328, 0.5
  %v330 = vtanh.pop %v329
  %v331 = vmul.f32 %v330, 0.5
  %v332 = vadd.f32 %v331, 0.5
  %v333 = vtanh.pop %v328
  %335 = vrot.lane.b32.xlu0 %v298, 32
  %v336 = vpop.permute.xlu0 %335
  %v338 = vmul.f32 %v332, %v336
  %340 = vrot.lane.b32.xlu0 %v333, 32
  %v341 = vpop.permute.xlu0 %340
  %v343 = vmul.f32 %v332, %v341
  %345 = vrot.lane.b32.xlu0 %v343, 32
  %v346 = vpop.permute.xlu0 %345
  %v348 = vadd.f32 %v338, %v346
  %v349 = vtanh.pop %v348
  %351 = vrot.lane.b32.xlu0 %v349, 32
  %v352 = vpop.permute.xlu0 %351
  %v354 = vmul.f32 %v332, %v352
  %356 = vrot.lane.b32.xlu0 %v348, 96
  %v357 = vpop.permute.xlu0 %356
  %359 = vst.msk [vmem:[#allocation3] sm:$0xff] %vm25, %v357
  %361 = vrot.lane.b32.xlu0 %v354, 64
  %v362 = vpop.permute.xlu0 %361
  %364 = vst.msk [vmem:[#allocation2] sm:$0xff] %vm25, %v362
  %s365 = scalar_lea.vmem %s2, 32
  %366 = vst.msk [vmem:[%s365] sm:$0xff] %vm25, %v362
  %v367 = vld [vmem:[#allocation2] sm:$0xff]
  %v368 = vld [vmem:[#allocation3] sm:$0xff]
  %s369 = scalar_lea.vmem %s0, 40
  %v370 = vld [vmem:[%s369] sm:$0xff]
  %v371 = vld [vmem:[%s1] sm:$0xff]
  %v372 = vld [vmem:[%s1 + $0x8] sm:$0xff]
  %v373 = vld [vmem:[%s1 + $0x10] sm:$0xff]
  %v374 = vld [vmem:[%s1 + $0x18] sm:$0xff]
  %v376 = vsel %vm25, %v367, 0
  %378 = vmatpush.msra.mxu0 0.0
  %379 = vmatpush.msra.mxu0 0.0
  %380 = vmatpush.msra.mxu0 0.0
  %381 = vmatpush.msra.mxu0 0.0
  %382 = vmatpush.msra.mxu0 0.0
  %383 = vmatpush.msra.mxu0 0.0
  %384 = vmatpush.msra.mxu0 0.0
  %385 = vmatpush.msra.mxu0 0.0
  %386 = vmatpush.msra.mxu0 0.0
  %387 = vmatpush.msra.mxu0 0.0
  %388 = vmatpush.msra.mxu0 0.0
  %389 = vmatpush.msra.mxu0 0.0
  %390 = vmatpush.msra.mxu0 %v374
  %391 = vmatpush.msra.mxu0 %v373
  %392 = vmatpush.msra.mxu0 %v372
  %393 = vmatpush.msra.mxu0 %v371
  %394 = vmatmul.f32.gmra.mxu0 %v376
  %v395 = vpop.f32.mrf.mxu0
  %v396 = vadd.f32 0.0, %v395
  %397 = vdwg.mxu0
  %v398 = vadd.f32 %v370, %v396
  %v399 = vmul.f32 %v398, 0.5
  %v400 = vtanh.pop %v399
  %v401 = vmul.f32 %v400, 0.5
  %v402 = vadd.f32 %v401, 0.5
  %v403 = vtanh.pop %v398
  %405 = vrot.lane.b32.xlu0 %v368, 32
  %v406 = vpop.permute.xlu0 %405
  %v408 = vmul.f32 %v402, %v406
  %410 = vrot.lane.b32.xlu0 %v403, 32
  %v411 = vpop.permute.xlu0 %410
  %v413 = vmul.f32 %v402, %v411
  %415 = vrot.lane.b32.xlu0 %v413, 32
  %v416 = vpop.permute.xlu0 %415
  %v418 = vadd.f32 %v408, %v416
  %v419 = vtanh.pop %v418
  %421 = vrot.lane.b32.xlu0 %v419, 32
  %v422 = vpop.permute.xlu0 %421
  %v424 = vmul.f32 %v402, %v422
  %426 = vrot.lane.b32.xlu0 %v418, 96
  %v427 = vpop.permute.xlu0 %426
  %429 = vst.msk [vmem:[#allocation3] sm:$0xff] %vm25, %v427
  %431 = vrot.lane.b32.xlu0 %v424, 64
  %v432 = vpop.permute.xlu0 %431
  %434 = vst.msk [vmem:[#allocation2] sm:$0xff] %vm25, %v432
  %s435 = scalar_lea.vmem %s2, 40
  %436 = vst.msk [vmem:[%s435] sm:$0xff] %vm25, %v432
  %v437 = vld [vmem:[#allocation2] sm:$0xff]
  %v438 = vld [vmem:[#allocation3] sm:$0xff]
  %s439 = scalar_lea.vmem %s0, 48
  %v440 = vld [vmem:[%s439] sm:$0xff]
  %v441 = vld [vmem:[%s1] sm:$0xff]
  %v442 = vld [vmem:[%s1 + $0x8] sm:$0xff]
  %v443 = vld [vmem:[%s1 + $0x10] sm:$0xff]
  %v444 = vld [vmem:[%s1 + $0x18] sm:$0xff]
  %v446 = vsel %vm25, %v437, 0
  %448 = vmatpush.msra.mxu0 0.0
  %449 = vmatpush.msra.mxu0 0.0
  %450 = vmatpush.msra.mxu0 0.0
  %451 = vmatpush.msra.mxu0 0.0
  %452 = vmatpush.msra.mxu0 0.0
  %453 = vmatpush.msra.mxu0 0.0
  %454 = vmatpush.msra.mxu0 0.0
  %455 = vmatpush.msra.mxu0 0.0
  %456 = vmatpush.msra.mxu0 0.0
  %457 = vmatpush.msra.mxu0 0.0
  %458 = vmatpush.msra.mxu0 0.0
  %459 = vmatpush.msra.mxu0 0.0
  %460 = vmatpush.msra.mxu0 %v444
  %461 = vmatpush.msra.mxu0 %v443
  %462 = vmatpush.msra.mxu0 %v442
  %463 = vmatpush.msra.mxu0 %v441
  %464 = vmatmul.f32.gmra.mxu0 %v446
  %v465 = vpop.f32.mrf.mxu0
  %v466 = vadd.f32 0.0, %v465
  %467 = vdwg.mxu0
  %v468 = vadd.f32 %v440, %v466
  %v469 = vmul.f32 %v468, 0.5
  %v470 = vtanh.pop %v469
  %v471 = vmul.f32 %v470, 0.5
  %v472 = vadd.f32 %v471, 0.5
  %v473 = vtanh.pop %v468
  %475 = vrot.lane.b32.xlu0 %v438, 32
  %v476 = vpop.permute.xlu0 %475
  %v478 = vmul.f32 %v472, %v476
  %480 = vrot.lane.b32.xlu0 %v473, 32
  %v481 = vpop.permute.xlu0 %480
  %v483 = vmul.f32 %v472, %v481
  %485 = vrot.lane.b32.xlu0 %v483, 32
  %v486 = vpop.permute.xlu0 %485
  %v488 = vadd.f32 %v478, %v486
  %v489 = vtanh.pop %v488
  %491 = vrot.lane.b32.xlu0 %v489, 32
  %v492 = vpop.permute.xlu0 %491
  %v494 = vmul.f32 %v472, %v492
  %496 = vrot.lane.b32.xlu0 %v488, 96
  %v497 = vpop.permute.xlu0 %496
  %499 = vst.msk [vmem:[#allocation3] sm:$0xff] %vm25, %v497
  %501 = vrot.lane.b32.xlu0 %v494, 64
  %v502 = vpop.permute.xlu0 %501
  %504 = vst.msk [vmem:[#allocation2] sm:$0xff] %vm25, %v502
  %s505 = scalar_lea.vmem %s2, 48
  %506 = vst.msk [vmem:[%s505] sm:$0xff] %vm25, %v502
  %v507 = vld [vmem:[#allocation2] sm:$0xff]
  %v508 = vld [vmem:[#allocation3] sm:$0xff]
  %s509 = scalar_lea.vmem %s0, 56
  %v510 = vld [vmem:[%s509] sm:$0xff]
  %v511 = vld [vmem:[%s1] sm:$0xff]
  %v512 = vld [vmem:[%s1 + $0x8] sm:$0xff]
  %v513 = vld [vmem:[%s1 + $0x10] sm:$0xff]
  %v514 = vld [vmem:[%s1 + $0x18] sm:$0xff]
  %v516 = vsel %vm25, %v507, 0
  %518 = vmatpush.msra.mxu0 0.0
  %519 = vmatpush.msra.mxu0 0.0
  %520 = vmatpush.msra.mxu0 0.0
  %521 = vmatpush.msra.mxu0 0.0
  %522 = vmatpush.msra.mxu0 0.0
  %523 = vmatpush.msra.mxu0 0.0
  %524 = vmatpush.msra.mxu0 0.0
  %525 = vmatpush.msra.mxu0 0.0
  %526 = vmatpush.msra.mxu0 0.0
  %527 = vmatpush.msra.mxu0 0.0
  %528 = vmatpush.msra.mxu0 0.0
  %529 = vmatpush.msra.mxu0 0.0
  %530 = vmatpush.msra.mxu0 %v514
  %531 = vmatpush.msra.mxu0 %v513
  %532 = vmatpush.msra.mxu0 %v512
  %533 = vmatpush.msra.mxu0 %v511
  %534 = vmatmul.f32.gmra.mxu0 %v516
  %v535 = vpop.f32.mrf.mxu0
  %v536 = vadd.f32 0.0, %v535
  %537 = vdwg.mxu0
  %v538 = vadd.f32 %v510, %v536
  %v539 = vmul.f32 %v538, 0.5
  %v540 = vtanh.pop %v539
  %v541 = vmul.f32 %v540, 0.5
  %v542 = vadd.f32 %v541, 0.5
  %v543 = vtanh.pop %v538
  %545 = vrot.lane.b32.xlu0 %v508, 32
  %v546 = vpop.permute.xlu0 %545
  %v548 = vmul.f32 %v542, %v546
  %550 = vrot.lane.b32.xlu0 %v543, 32
  %v551 = vpop.permute.xlu0 %550
  %v553 = vmul.f32 %v542, %v551
  %555 = vrot.lane.b32.xlu0 %v553, 32
  %v556 = vpop.permute.xlu0 %555
  %v558 = vadd.f32 %v548, %v556
  %v559 = vtanh.pop %v558
  %561 = vrot.lane.b32.xlu0 %v559, 32
  %v562 = vpop.permute.xlu0 %561
  %v564 = vmul.f32 %v542, %v562
  %566 = vrot.lane.b32.xlu0 %v558, 96
  %v567 = vpop.permute.xlu0 %566
  %569 = vst.msk [vmem:[#allocation3] sm:$0xff] %vm25, %v567
  %571 = vrot.lane.b32.xlu0 %v564, 64
  %v572 = vpop.permute.xlu0 %571
  %574 = vst.msk [vmem:[#allocation2] sm:$0xff] %vm25, %v572
  %s575 = scalar_lea.vmem %s2, 56
  %576 = vst.msk [vmem:[%s575] sm:$0xff] %vm25, %v572
  // Predicated region
  $region14: #{single_rnn_forward.1} parent=0 // pred_check
    _
  $region15: #{single_rnn_forward.1} parent=0 // pred_check_branch
    %578 = sbr.rel (0) target = $region17
  $region16: #{single_rnn_forward.1} parent=0 // pred_region
    _
  $region17: #{single_rnn_forward.1} parent=0 // pred_fallthru
    _
  // Predicated region
  $region18: #{single_rnn_forward.1} parent=0 // pred_check
    _
  $region19: #{single_rnn_forward.1} parent=0 // pred_check_branch
    %580 = sbr.rel (0) target = $region21
  $region20: #{single_rnn_forward.1} parent=0 // pred_region
    _
  $region21: #{single_rnn_forward.1} parent=0 // pred_fallthru
    _

</llo_original>
